<compile_context>
chip_gen: v7x
topology: tpu7x:2x2x1
jax: 0.10.0
libtpu: 0.0.40
codegen_flags: <defaults>
</compile_context>

<pallas_src>
import jax
import jax.numpy as jnp
from jax.experimental import pallas as pl
from jax.experimental.pallas import tpu as pltpu


def _round_up(n, m):
    return ((n + m - 1) // m) * m


def _adaptive_lr_kernel(x_ref, w1_ref, b1_ref, w2_ref, b2_ref, o_ref):
    """One lane-major batch tile.

    x_ref : (5, TB)   features x batch-lanes, streamed per grid step
    w1_ref: (16, 5)   hidden.weight (PyTorch (out, in) layout), VMEM-resident
    b1_ref: (16, 1)   hidden.bias column, VMEM-resident
    w2_ref: (1, 16)   output.weight (out, in) layout, VMEM-resident
    b2_ref: (1,)      output.bias, SMEM scalar
    o_ref : (1, TB)   sigmoid output, lane-dense unmasked stores
    """
    x = x_ref[...]                                         # (5, TB)

    # Layer 1 on the MXU: (16,5) @ (5,TB) -> (16,TB).  The MXU is otherwise
    # idle; this frees the VALU slot the old broadcast-FMA loop saturated.
    h = jnp.dot(w1_ref[...], x,
                preferred_element_type=jnp.float32,
                precision=jax.lax.Precision.HIGHEST)
    h = jnp.maximum(h + b1_ref[...], 0.0)                  # bias + ReLU (VPU)

    # Layer 2 on the MXU: (1,16) @ (16,TB) -> (1,TB); SMEM scalar bias.
    z = jnp.dot(w2_ref[...], h,
                preferred_element_type=jnp.float32,
                precision=jax.lax.Precision.HIGHEST)
    o_ref[...] = jax.nn.sigmoid(z + b2_ref[0]).astype(o_ref.dtype)   # EUP


def adaptive_lr_forward_feature_major(x_fm, w1, b1, w2, b2, *,
                                      max_tile=32 * 1024, x_buffers=2):
    """x_fm: (5, B) feature-major -> (B, 1) f32 learning-rate scale in (0,1).

    w1: (16, 5) hidden.weight   b1: (16,) hidden.bias
    w2: (1, 16) output.weight   b2: (1,)  output.bias
    """
    F, B = x_fm.shape
    H = w1.shape[0]

    # Lane tile: multiple of 128; big enough to amortize per-step pipeline
    # overhead against HBM bandwidth, small enough to (a) keep >= 2 grid
    # steps once the batch allows it (v7x megacore) and (b) fit comfortably
    # in scoped VMEM (v5e 16 MiB / v6e 32 MiB / v7x 32 of 64 MiB).
    tb = min(max_tile, _round_up(B, 128))
    half = _round_up(pl.cdiv(B, 2), 128)
    if B > 256 and half < tb:
        tb = max(128, half)
    grid = pl.cdiv(B, tb)

    # VMEM budget per tile: x block pads 5->8 sublanes (x buffers), out block
    # pads 1->8 sublanes (x2 buffers), plus the (16, tb) f32 hidden
    # intermediate; 2x headroom.  Set the scoped limit explicitly so larger
    # max_tile choices (e.g. 64K-128K lanes on v7x) don't trip the default.
    est = (x_buffers * 8 * tb + 2 * 8 * tb + 2 * H * tb) * 4
    vmem_limit = int(min(max(2 * est, 32 << 20), 64 << 20))

    x_spec_kwargs = {}
    if x_buffers > 2:
        # Deeper buffering on the single streamed operand only (weights never
        # change block index and are not re-fetched).
        x_spec_kwargs["pipeline_mode"] = pl.Buffered(x_buffers)

    out = pl.pallas_call(
        _adaptive_lr_kernel,
        out_shape=jax.ShapeDtypeStruct((1, B), jnp.float32),
        grid=(grid,),
        in_specs=[
            pl.BlockSpec((F, tb), lambda i: (0, i), **x_spec_kwargs),  # stream
            pl.BlockSpec((H, F), lambda i: (0, 0)),                # W1 resident
            pl.BlockSpec((H, 1), lambda i: (0, 0)),                # b1 resident
            pl.BlockSpec((1, H), lambda i: (0, 0)),                # W2 resident
            pl.BlockSpec(memory_space=pltpu.MemorySpace.SMEM),     # b2 scalar
        ],
        out_specs=pl.BlockSpec((1, tb), lambda i: (0, i)),         # lane-dense
        compiler_params=pltpu.CompilerParams(
            dimension_semantics=("parallel",),      # split across TCs on v7x
            vmem_limit_bytes=vmem_limit,
        ),
    )(x_fm.astype(jnp.float32),
      w1.astype(jnp.float32),
      b1.reshape(H, 1).astype(jnp.float32),
      w2.reshape(1, H).astype(jnp.float32),
      b2.reshape(1).astype(jnp.float32))

    return out[0][:, None]                                         # (B, 1)


def adaptive_lr_forward(x, w1, b1, w2, b2, *, max_tile=32 * 1024,
                        small_batch_threshold=16 * 1024, use_kernel=None):
    """x: (B, 5) batch-major (PyTorch layout) -> (B, 1) scale in (0, 1)."""
    B = x.shape[0]
    if use_kernel is None:
        use_kernel = B >= small_batch_threshold
    if not use_kernel:
        # Small-batch fallback: one fused XLA op beats any standalone kernel
        # (the RL-controller B=8 case is ~200 FLOPs vs several us of launches).
        h = jnp.maximum(x @ w1.T + b1, 0.0)
        return jax.nn.sigmoid(h @ w2.reshape(-1, 1) + b2)
    # NOTE: large-batch producers should emit x feature-major (5, B) so this
    # single transpose HLO also disappears; there is no padded copy any more.
    return adaptive_lr_forward_feature_major(
        x.T, w1, b1, w2, b2, max_tile=max_tile)


def init_params(key):
    """Deterministic init mimicking PyTorch Linear default (U(+-1/sqrt(fan_in)))."""
    k1, k2, k3, k4 = jax.random.split(key, 4)
    lim1 = 1.0 / jnp.sqrt(5.0)
    lim2 = 1.0 / jnp.sqrt(16.0)
    w1 = jax.random.uniform(k1, (16, 5), jnp.float32, -lim1, lim1)   # hidden.weight
    b1 = jax.random.uniform(k2, (16,), jnp.float32, -lim1, lim1)     # hidden.bias
    w2 = jax.random.uniform(k3, (1, 16), jnp.float32, -lim2, lim2)   # output.weight
    b2 = jax.random.uniform(k4, (1,), jnp.float32, -lim2, lim2)      # output.bias
    return w1, b1, w2, b2


if __name__ == "__main__":
    key = jax.random.PRNGKey(0)
    kx, kx2, kp = jax.random.split(key, 3)

    w1, b1, w2, b2 = init_params(kp)

    def reference(x):
        # Exact-f32 elementwise reference (same math as the PyTorch forward).
        h = jnp.maximum((x[:, None, :] * w1[None, :, :]).sum(-1) + b1, 0.0)
        z = (h * w2[0][None, :]).sum(-1, keepdims=True) + b2
        return jax.nn.sigmoid(z)

    # 1) Tiny RL-controller batch, forced through the Pallas kernel path.
    x_small = jax.random.normal(kx, (8, 5), jnp.float32)
    out_small = jax.block_until_ready(
        adaptive_lr_forward(x_small, w1, b1, w2, b2, use_kernel=True))
    assert out_small.shape == (8, 1)
    assert jnp.allclose(out_small, reference(x_small), atol=1e-4, rtol=1e-4)

    # 2) Multi-tile grid with a ragged last tile (300 = 2*128 + 44), covering
    #    the partial-block path used at large batch sizes.
    x_med = jax.random.normal(kx2, (300, 5), jnp.float32)
    out_med = jax.block_until_ready(
        adaptive_lr_forward(x_med, w1, b1, w2, b2, max_tile=128,
                            use_kernel=True))
    assert out_med.shape == (300, 1)
    assert jnp.allclose(out_med, reference(x_med), atol=1e-4, rtol=1e-4)

    # 3) Small-batch fallback path (single fused XLA op).
    out_fb = jax.block_until_ready(
        adaptive_lr_forward(x_small, w1, b1, w2, b2))
    assert jnp.allclose(out_fb, reference(x_small), atol=1e-4, rtol=1e-4)

    print("KERNEL_OK")
</pallas_src>

<mosaic_0001>
module attributes {stable_mosaic.version = 11 : i64} {
  func.func @_adaptive_lr_kernel(%arg0: i32, %arg1: memref<5x128xf32, #tpu.memory_space<vmem>>, %arg2: memref<16x5xf32, #tpu.memory_space<vmem>>, %arg3: memref<16x1xf32, #tpu.memory_space<vmem>>, %arg4: memref<1x16xf32, #tpu.memory_space<vmem>>, %arg5: memref<1xf32, #tpu.memory_space<smem>>, %arg6: memref<1x128xf32, #tpu.memory_space<vmem>>) attributes {dimension_semantics = [#tpu.dimension_semantics<parallel>], iteration_bounds = array<i64: 1>, scalar_prefetch = 0 : i64, scratch_operands = 0 : i64, tpu.core_type = #tpu.core_type<tc>, window_params = [{transform_indices = @transform_0, window_bounds = array<i64: 5, 128>}, {pipeline_mode = #tpu.pipeline_mode<synchronous>, transform_indices = @transform_1, window_bounds = array<i64: 16, 5>}, {pipeline_mode = #tpu.pipeline_mode<synchronous>, transform_indices = @transform_2, window_bounds = array<i64: 16, 1>}, {pipeline_mode = #tpu.pipeline_mode<synchronous>, transform_indices = @transform_3, window_bounds = array<i64: 1, 16>}, {transform_indices = @transform_4, window_bounds = array<i64: 1>}, {transform_indices = @transform_5, window_bounds = array<i64: 1, 128>}]} {
    %c0 = arith.constant 0 : index
    %c0_0 = arith.constant 0 : index
    %0 = vector.load %arg1[%c0, %c0_0] : memref<5x128xf32, #tpu.memory_space<vmem>>, vector<5x128xf32>
    %c0_1 = arith.constant 0 : index
    %c0_2 = arith.constant 0 : index
    %1 = vector.load %arg2[%c0_1, %c0_2] : memref<16x5xf32, #tpu.memory_space<vmem>>, vector<16x5xf32>
    %cst = arith.constant dense<0.000000e+00> : vector<16x128xf32>
    %2 = tpu.matmul %1, %0, %cst {dimension_numbers = #tpu.dot_dimension_numbers<[1], [0], [0], [1], [0, 0, 1, 1], [], []>, precision = #tpu.contract_precision<fp32>} : vector<16x5xf32>, vector<5x128xf32>, vector<16x128xf32> -> vector<16x128xf32>
    %c0_3 = arith.constant 0 : index
    %c0_4 = arith.constant 0 : index
    %3 = vector.load %arg3[%c0_3, %c0_4] : memref<16x1xf32, #tpu.memory_space<vmem>>, vector<16x1xf32>
    %4 = vector.broadcast %3 : vector<16x1xf32> to vector<16x128xf32>
    %5 = arith.addf %2, %4 : vector<16x128xf32>
    %cst_5 = arith.constant 0.000000e+00 : f32
    %6 = vector.broadcast %cst_5 : f32 to vector<16x128xf32>
    %7 = arith.maximumf %5, %6 : vector<16x128xf32>
    %c0_6 = arith.constant 0 : index
    %c0_7 = arith.constant 0 : index
    %8 = vector.load %arg4[%c0_6, %c0_7] : memref<1x16xf32, #tpu.memory_space<vmem>>, vector<1x16xf32>
    %cst_8 = arith.constant dense<0.000000e+00> : vector<1x128xf32>
    %9 = tpu.matmul %8, %7, %cst_8 {dimension_numbers = #tpu.dot_dimension_numbers<[1], [0], [0], [1], [0, 0, 1, 1], [], []>, precision = #tpu.contract_precision<fp32>} : vector<1x16xf32>, vector<16x128xf32>, vector<1x128xf32> -> vector<1x128xf32>
    %c0_9 = arith.constant 0 : index
    %10 = memref.load %arg5[%c0_9] : memref<1xf32, #tpu.memory_space<smem>>
    %11 = vector.broadcast %10 : f32 to vector<1x128xf32>
    %12 = arith.addf %9, %11 : vector<1x128xf32>
    %13 = arith.negf %12 : vector<1x128xf32>
    %14 = math.exp %13 : vector<1x128xf32>
    %cst_10 = arith.constant 1.000000e+00 : f32
    %15 = vector.broadcast %cst_10 : f32 to vector<1x128xf32>
    %16 = arith.addf %15, %14 : vector<1x128xf32>
    %17 = arith.divf %15, %16 : vector<1x128xf32>
    %c0_11 = arith.constant 0 : index
    %c0_12 = arith.constant 0 : index
    %18 = vector.load %arg6[%c0_11, %c0_12] : memref<1x128xf32, #tpu.memory_space<vmem>>, vector<1x128xf32>
    tpu.vector_store %arg6[%c0_11, %c0_12], %17 {strides = array<i32>} : memref<1x128xf32, #tpu.memory_space<vmem>>, vector<1x128xf32>,
    return
  }
  func.func @transform_0(%arg0: i32) -> (i32, i32) {
    %c0_i32 = arith.constant 0 : i32
    %c0_i32_0 = arith.constant 0 : i32
    return %c0_i32, %arg0 : i32, i32
  }
  func.func @transform_1(%arg0: i32) -> (i32, i32) {
    %c0_i32 = arith.constant 0 : i32
    %c0_i32_0 = arith.constant 0 : i32
    %c0_i32_1 = arith.constant 0 : i32
    return %c0_i32, %c0_i32_0 : i32, i32
  }
  func.func @transform_2(%arg0: i32) -> (i32, i32) {
    %c0_i32 = arith.constant 0 : i32
    %c0_i32_0 = arith.constant 0 : i32
    %c0_i32_1 = arith.constant 0 : i32
    return %c0_i32, %c0_i32_0 : i32, i32
  }
  func.func @transform_3(%arg0: i32) -> (i32, i32) {
    %c0_i32 = arith.constant 0 : i32
    %c0_i32_0 = arith.constant 0 : i32
    %c0_i32_1 = arith.constant 0 : i32
    return %c0_i32, %c0_i32_0 : i32, i32
  }
  func.func @transform_4(%arg0: i32) -> i32 {
    %c0_i32 = arith.constant 0 : i32
    %c0_i32_0 = arith.constant 0 : i32
    return %c0_i32 : i32
  }
  func.func @transform_5(%arg0: i32) -> (i32, i32) {
    %c0_i32 = arith.constant 0 : i32
    %c0_i32_0 = arith.constant 0 : i32
    return %c0_i32, %arg0 : i32, i32
  }
}

</mosaic_0001>

<llo_original>
// kernel: tpu_custom_call.1
$region0: #{tpu_custom_call.1}
  #allocation0 [shape = 'u32[]', space=smem, size = 0x4, offset = 0x4, fixed_abs, tag = 'smem constant byte address 0x4 - core index']
  #allocation1 [shape = 'u32[144,128]{1,0:T(1,128)}', space=vmem, size = 0x12000, scoped, tag = 'internal scratch']
  #allocation2 [shape = 'f32[1]{0:T(128)S(6)}', space=smem, size = 0x200, scoped, tag = 'scoped memory for tpu_custom_call.1']
  %s0 = inlined_call_operand.vmem [shape: f32[5,8], index: 0, kind: input, shape index: {}]
  %s1 = inlined_call_operand.vmem [shape: f32[16,5], index: 1, kind: input, shape index: {}]
  %s2 = inlined_call_operand.vmem [shape: f32[16,1], index: 2, kind: input, shape index: {}]
  %s3 = inlined_call_operand.vmem [shape: f32[1,16], index: 3, kind: input, shape index: {}]
  %s4 = inlined_call_operand.<no memory space> [shape: f32[1], index: 4, kind: input, shape index: {}]
  %s5 = inlined_call_operand.hbm [shape: f32[1,8], index: 5, kind: output, shape index: {}]
  %s6 = sld [smem:[#allocation0]]
  $region30: #{tpu_custom_call.1} parent=0
    _
  %s8 = ssub.s32 1, %s6
  %s9 = scalar_select 0, %s8, %s6
  %10 = sst [smem:[#allocation2]] %s4
  $region1: #{tpu_custom_call.1} parent=0
    #allocation3 [shape = 'u8[512]{0}', space=vmem, size = 0x400, scoped, tag = 'output window, operand 0, single buffered']
    #allocation4 [shape = 's32[1]{0}', space=sflag, size = 0x4, scoped, tag = 'scoped memory for tpu_custom_call.1']
    %11 = vsyncpa [#allocation4], 0
    // Predicated region
    $region2: #{tpu_custom_call.1} parent=1 // pred_check
      _
    $region3: #{tpu_custom_call.1} parent=1 // pred_check_branch
      %13 = sbr.rel (0) target = $region5
    $region4: #{tpu_custom_call.1} parent=1 // pred_region
      _
    $region5: #{tpu_custom_call.1} parent=1 // pred_fallthru
      _
    // Predicated region
    $region6: #{tpu_custom_call.1} parent=1 // pred_check
      _
    $region7: #{tpu_custom_call.1} parent=1 // pred_check_branch
      %15 = sbr.rel (0) target = $region9
    $region8: #{tpu_custom_call.1} parent=1 // pred_region
      _
    $region9: #{tpu_custom_call.1} parent=1 // pred_fallthru
      _
    // Predicated region
    $region10: #{tpu_custom_call.1} parent=1 // pred_check
      _
    $region11: #{tpu_custom_call.1} parent=1 // pred_check_branch
      %17 = sbr.rel (0) target = $region13
    $region12: #{tpu_custom_call.1} parent=1 // pred_region
      _
    $region13: #{tpu_custom_call.1} parent=1 // pred_fallthru
      _
    // Predicated region
    $region14: #{tpu_custom_call.1} parent=1 // pred_check
      _
    $region15: #{tpu_custom_call.1} parent=1 // pred_check_branch
      %19 = sbr.rel (0) target = $region17
    $region16: #{tpu_custom_call.1} parent=1 // pred_region
      _
    $region17: #{tpu_custom_call.1} parent=1 // pred_fallthru
      _
    // Predicated region
    $region18: #{tpu_custom_call.1} parent=1 // pred_check
      _
    $region19: #{tpu_custom_call.1} parent=1 // pred_check_branch
      %21 = sbr.rel (0) target = $region21
    $region20: #{tpu_custom_call.1} parent=1 // pred_region
      _
    $region21: #{tpu_custom_call.1} parent=1 // pred_fallthru
      _
    %v22 = vld [vmem:[%s0] sm:$0x1f]
    %v23 = vld [vmem:[%s1] sm:$0xff]
    %v24 = vld [vmem:[%s1 + $0x8] sm:$0xff]
    %v25 = vld [vmem:[%s2] sm:$0xff]
    %v26 = vld [vmem:[%s2 + $0x8] sm:$0xff]
    %28 = vset.pattern.permute.xlu0 0
    %29 = vperm.xlu0 %28, %v25
    %v30 = vpop.permute.xlu0 %29
    %33 = vset.pattern.permute.xlu0 0
    %34 = vperm.xlu0 %33, %v26
    %v35 = vpop.permute.xlu0 %34
    %vm37 = vcmask 39936
    %v39 = vsel %vm37, %v23, 0
    %v42 = vsel %vm37, %v24, 0
    %vm44 = vcmask 1044480
    %v46 = vsel %vm44, %v22, 0
    %48 = vmatprep.subr.mxu0 0.0
    %v49 = vand.u32 %v46, 4294901760
    %50 = vmatpush1.msra.mxu0 %v49
    %51 = vmatprep.subr.mxu0 0.0
    %52 = vmatpush1.msra.mxu0 0.0
    %53 = vmatprep.subr.mxu0 0.0
    %54 = vmatpush1.msra.mxu0 0.0
    %55 = vmatprep.subr.mxu0 0.0
    %56 = vmatpush1.msra.mxu0 0.0
    %57 = vmatprep.subr.mxu0 0.0
    %58 = vmatpush1.msra.mxu0 0.0
    %59 = vmatprep.subr.mxu0 0.0
    %60 = vmatpush1.msra.mxu0 0.0
    %61 = vmatprep.subr.mxu0 0.0
    %62 = vmatpush1.msra.mxu0 0.0
    %63 = vmatprep.subr.mxu0 0.0
    %64 = vmatpush1.msra.mxu0 0.0
    %65 = vmatprep.subr.mxu0 0.0
    %66 = vmatpush1.msra.mxu0 0.0
    %67 = vmatprep.subr.mxu0 0.0
    %68 = vmatpush1.msra.mxu0 0.0
    %69 = vmatprep.subr.mxu0 0.0
    %70 = vmatpush1.msra.mxu0 0.0
    %71 = vmatprep.subr.mxu0 0.0
    %72 = vmatpush1.msra.mxu0 0.0
    %73 = vmatprep.subr.mxu0 0.0
    %74 = vmatpush1.msra.mxu0 0.0
    %75 = vmatprep.subr.mxu0 0.0
    %76 = vmatpush1.msra.mxu0 0.0
    %77 = vmatprep.subr.mxu0 0.0
    %78 = vmatpush1.msra.mxu0 0.0
    %79 = vmatprep.subr.mxu0 0.0
    %80 = vmatpush1.msra.mxu0 0.0
    %81 = vmatprep.subr.mxu0 0.0
    %82 = vmatpush1.msra.mxu0 0.0
    %83 = vmatprep.subr.mxu0 0.0
    %84 = vmatpush1.msra.mxu0 0.0
    %85 = vmatprep.subr.mxu0 0.0
    %86 = vmatpush1.msra.mxu0 0.0
    %87 = vmatprep.subr.mxu0 0.0
    %88 = vmatpush1.msra.mxu0 0.0
    %89 = vmatprep.subr.mxu0 0.0
    %90 = vmatpush1.msra.mxu0 0.0
    %91 = vmatprep.subr.mxu0 0.0
    %92 = vmatpush1.msra.mxu0 0.0
    %93 = vmatprep.subr.mxu0 0.0
    %94 = vmatpush1.msra.mxu0 0.0
    %95 = vmatprep.subr.mxu0 0.0
    %96 = vmatpush1.msra.mxu0 0.0
    %97 = vmatprep.subr.mxu0 0.0
    %98 = vmatpush1.msra.mxu0 0.0
    %99 = vmatprep.subr.mxu0 0.0
    %100 = vmatpush1.msra.mxu0 0.0
    %101 = vmatprep.subr.mxu0 0.0
    %102 = vmatpush1.msra.mxu0 0.0
    %103 = vmatprep.subr.mxu0 0.0
    %104 = vmatpush1.msra.mxu0 0.0
    %105 = vmatprep.subr.mxu0 0.0
    %106 = vmatpush1.msra.mxu0 0.0
    %107 = vmatprep.subr.mxu0 0.0
    %108 = vmatpush1.msra.mxu0 0.0
    %109 = vmatprep.subr.mxu0 0.0
    %110 = vmatpush1.msra.mxu0 0.0
    %111 = vmatprep.subr.mxu0 0.0
    %112 = vmatpush1.msra.mxu0 0.0
    %113 = vmatprep.mubr.f32.mxu0 0.0
    %v114 = vand.u32 %v39, 4294901760
    %v115 = vsub.f32 %v39, %v114
    %v116 = vand.u32 %v115, 4294901760
    %v117 = vsub.f32 %v115, %v116
    %v118 = vand.u32 %v117, 4294901760
    %119 = vmatmul.mubr.f32.gmra.mrb[0].mxu0 %v118
    %v120 = vpop.f32.mrb[0].mxu0
    %v121 = vadd.f32 %v30, %v120
    %v122 = vpop.f32.mrb[0].mxu0
    %123 = vmatprep.mubr.f32.mxu0 0.0
    %v124 = vand.u32 %v42, 4294901760
    %v125 = vsub.f32 %v42, %v124
    %v126 = vand.u32 %v125, 4294901760
    %v127 = vsub.f32 %v125, %v126
    %v128 = vand.u32 %v127, 4294901760
    %129 = vmatmul.mubr.f32.gmra.mrb[0].mxu0 %v128
    %v130 = vpop.f32.mrb[0].mxu0
    %v131 = vadd.f32 %v35, %v130
    %v132 = vpop.f32.mrb[0].mxu0
    %133 = vdwg.mxu0
    %134 = vmatprep.subr.mxu0 0.0
    %v135 = vand.u32 %v46, 4294901760
    %v136 = vsub.f32 %v46, %v135
    %v137 = vand.u32 %v136, 4294901760
    %v138 = vsub.f32 %v136, %v137
    %v139 = vand.u32 %v138, 4294901760
    %140 = vmatpush1.msra.mxu0 %v139
    %141 = vmatprep.subr.mxu0 0.0
    %142 = vmatpush1.msra.mxu0 0.0
    %143 = vmatprep.subr.mxu0 0.0
    %144 = vmatpush1.msra.mxu0 0.0
    %145 = vmatprep.subr.mxu0 0.0
    %146 = vmatpush1.msra.mxu0 0.0
    %147 = vmatprep.subr.mxu0 0.0
    %148 = vmatpush1.msra.mxu0 0.0
    %149 = vmatprep.subr.mxu0 0.0
    %150 = vmatpush1.msra.mxu0 0.0
    %151 = vmatprep.subr.mxu0 0.0
    %152 = vmatpush1.msra.mxu0 0.0
    %153 = vmatprep.subr.mxu0 0.0
    %154 = vmatpush1.msra.mxu0 0.0
    %155 = vmatprep.subr.mxu0 0.0
    %156 = vmatpush1.msra.mxu0 0.0
    %157 = vmatprep.subr.mxu0 0.0
    %158 = vmatpush1.msra.mxu0 0.0
    %159 = vmatprep.subr.mxu0 0.0
    %160 = vmatpush1.msra.mxu0 0.0
    %161 = vmatprep.subr.mxu0 0.0
    %162 = vmatpush1.msra.mxu0 0.0
    %163 = vmatprep.subr.mxu0 0.0
    %164 = vmatpush1.msra.mxu0 0.0
    %165 = vmatprep.subr.mxu0 0.0
    %166 = vmatpush1.msra.mxu0 0.0
    %167 = vmatprep.subr.mxu0 0.0
    %168 = vmatpush1.msra.mxu0 0.0
    %169 = vmatprep.subr.mxu0 0.0
    %170 = vmatpush1.msra.mxu0 0.0
    %171 = vmatprep.subr.mxu0 0.0
    %172 = vmatpush1.msra.mxu0 0.0
    %173 = vmatprep.subr.mxu0 0.0
    %174 = vmatpush1.msra.mxu0 0.0
    %175 = vmatprep.subr.mxu0 0.0
    %176 = vmatpush1.msra.mxu0 0.0
    %177 = vmatprep.subr.mxu0 0.0
    %178 = vmatpush1.msra.mxu0 0.0
    %179 = vmatprep.subr.mxu0 0.0
    %180 = vmatpush1.msra.mxu0 0.0
    %181 = vmatprep.subr.mxu0 0.0
    %182 = vmatpush1.msra.mxu0 0.0
    %183 = vmatprep.subr.mxu0 0.0
    %184 = vmatpush1.msra.mxu0 0.0
    %185 = vmatprep.subr.mxu0 0.0
    %186 = vmatpush1.msra.mxu0 0.0
    %187 = vmatprep.subr.mxu0 0.0
    %188 = vmatpush1.msra.mxu0 0.0
    %189 = vmatprep.subr.mxu0 0.0
    %190 = vmatpush1.msra.mxu0 0.0
    %191 = vmatprep.subr.mxu0 0.0
    %192 = vmatpush1.msra.mxu0 0.0
    %193 = vmatprep.subr.mxu0 0.0
    %194 = vmatpush1.msra.mxu0 0.0
    %195 = vmatprep.subr.mxu0 0.0
    %196 = vmatpush1.msra.mxu0 0.0
    %197 = vmatprep.subr.mxu0 0.0
    %198 = vmatpush1.msra.mxu0 0.0
    %199 = vmatprep.subr.mxu0 0.0
    %200 = vmatpush1.msra.mxu0 0.0
    %201 = vmatprep.subr.mxu0 0.0
    %202 = vmatpush1.msra.mxu0 0.0
    %203 = vmatprep.mubr.f32.mxu0 0.0
    %v204 = vand.u32 %v39, 4294901760
    %205 = vmatmul.mubr.f32.gmra.mrb[0].mxu0 %v204
    %v206 = vpop.f32.mrb[0].mxu0
    %v207 = vadd.f32 %v121, %v206
    %v208 = vpop.f32.mrb[0].mxu0
    %209 = vmatprep.mubr.f32.mxu0 0.0
    %v210 = vand.u32 %v42, 4294901760
    %211 = vmatmul.mubr.f32.gmra.mrb[0].mxu0 %v210
    %v212 = vpop.f32.mrb[0].mxu0
    %v213 = vadd.f32 %v131, %v212
    %v214 = vpop.f32.mrb[0].mxu0
    %215 = vdwg.mxu0
    %216 = vmatprep.subr.mxu0 0.0
    %v217 = vand.u32 %v46, 4294901760
    %v218 = vsub.f32 %v46, %v217
    %219 = vmatpush1.msra.mxu0 %v218
    %220 = vmatprep.subr.mxu0 0.0
    %221 = vmatpush1.msra.mxu0 0.0
    %222 = vmatprep.subr.mxu0 0.0
    %223 = vmatpush1.msra.mxu0 0.0
    %224 = vmatprep.subr.mxu0 0.0
    %225 = vmatpush1.msra.mxu0 0.0
    %226 = vmatprep.subr.mxu0 0.0
    %227 = vmatpush1.msra.mxu0 0.0
    %228 = vmatprep.subr.mxu0 0.0
    %229 = vmatpush1.msra.mxu0 0.0
    %230 = vmatprep.subr.mxu0 0.0
    %231 = vmatpush1.msra.mxu0 0.0
    %232 = vmatprep.subr.mxu0 0.0
    %233 = vmatpush1.msra.mxu0 0.0
    %234 = vmatprep.subr.mxu0 0.0
    %235 = vmatpush1.msra.mxu0 0.0
    %236 = vmatprep.subr.mxu0 0.0
    %237 = vmatpush1.msra.mxu0 0.0
    %238 = vmatprep.subr.mxu0 0.0
    %239 = vmatpush1.msra.mxu0 0.0
    %240 = vmatprep.subr.mxu0 0.0
    %241 = vmatpush1.msra.mxu0 0.0
    %242 = vmatprep.subr.mxu0 0.0
    %243 = vmatpush1.msra.mxu0 0.0
    %244 = vmatprep.subr.mxu0 0.0
    %245 = vmatpush1.msra.mxu0 0.0
    %246 = vmatprep.subr.mxu0 0.0
    %247 = vmatpush1.msra.mxu0 0.0
    %248 = vmatprep.subr.mxu0 0.0
    %249 = vmatpush1.msra.mxu0 0.0
    %250 = vmatprep.subr.mxu0 0.0
    %251 = vmatpush1.msra.mxu0 0.0
    %252 = vmatprep.subr.mxu0 0.0
    %253 = vmatpush1.msra.mxu0 0.0
    %254 = vmatprep.subr.mxu0 0.0
    %255 = vmatpush1.msra.mxu0 0.0
    %256 = vmatprep.subr.mxu0 0.0
    %257 = vmatpush1.msra.mxu0 0.0
    %258 = vmatprep.subr.mxu0 0.0
    %259 = vmatpush1.msra.mxu0 0.0
    %260 = vmatprep.subr.mxu0 0.0
    %261 = vmatpush1.msra.mxu0 0.0
    %262 = vmatprep.subr.mxu0 0.0
    %263 = vmatpush1.msra.mxu0 0.0
    %264 = vmatprep.subr.mxu0 0.0
    %265 = vmatpush1.msra.mxu0 0.0
    %266 = vmatprep.subr.mxu0 0.0
    %267 = vmatpush1.msra.mxu0 0.0
    %268 = vmatprep.subr.mxu0 0.0
    %269 = vmatpush1.msra.mxu0 0.0
    %270 = vmatprep.subr.mxu0 0.0
    %271 = vmatpush1.msra.mxu0 0.0
    %272 = vmatprep.subr.mxu0 0.0
    %273 = vmatpush1.msra.mxu0 0.0
    %274 = vmatprep.subr.mxu0 0.0
    %275 = vmatpush1.msra.mxu0 0.0
    %276 = vmatprep.subr.mxu0 0.0
    %277 = vmatpush1.msra.mxu0 0.0
    %278 = vmatprep.subr.mxu0 0.0
    %279 = vmatpush1.msra.mxu0 0.0
    %280 = vmatprep.subr.mxu0 0.0
    %281 = vmatpush1.msra.mxu0 0.0
    %282 = vmatprep.mubr.f32.mxu0 0.0
    %v283 = vand.u32 %v39, 4294901760
    %v284 = vsub.f32 %v39, %v283
    %285 = vmatmul.mubr.f32.gmra.mrb[0].mxu0 %v284
    %v286 = vpop.f32.mrb[0].mxu0
    %v287 = vadd.f32 %v207, %v286
    %v288 = vpop.f32.mrb[0].mxu0
    %289 = vmatprep.mubr.f32.mxu0 0.0
    %v290 = vand.u32 %v42, 4294901760
    %v291 = vsub.f32 %v42, %v290
    %292 = vmatmul.mubr.f32.gmra.mrb[0].mxu0 %v291
    %v293 = vpop.f32.mrb[0].mxu0
    %v294 = vadd.f32 %v213, %v293
    %v295 = vpop.f32.mrb[0].mxu0
    %296 = vdwg.mxu0
    %297 = vmatprep.subr.mxu0 0.0
    %v298 = vand.u32 %v46, 4294901760
    %299 = vmatpush1.msra.mxu0 %v298
    %300 = vmatprep.subr.mxu0 0.0
    %301 = vmatpush1.msra.mxu0 0.0
    %302 = vmatprep.subr.mxu0 0.0
    %303 = vmatpush1.msra.mxu0 0.0
    %304 = vmatprep.subr.mxu0 0.0
    %305 = vmatpush1.msra.mxu0 0.0
    %306 = vmatprep.subr.mxu0 0.0
    %307 = vmatpush1.msra.mxu0 0.0
    %308 = vmatprep.subr.mxu0 0.0
    %309 = vmatpush1.msra.mxu0 0.0
    %310 = vmatprep.subr.mxu0 0.0
    %311 = vmatpush1.msra.mxu0 0.0
    %312 = vmatprep.subr.mxu0 0.0
    %313 = vmatpush1.msra.mxu0 0.0
    %314 = vmatprep.subr.mxu0 0.0
    %315 = vmatpush1.msra.mxu0 0.0
    %316 = vmatprep.subr.mxu0 0.0
    %317 = vmatpush1.msra.mxu0 0.0
    %318 = vmatprep.subr.mxu0 0.0
    %319 = vmatpush1.msra.mxu0 0.0
    %320 = vmatprep.subr.mxu0 0.0
    %321 = vmatpush1.msra.mxu0 0.0
    %322 = vmatprep.subr.mxu0 0.0
    %323 = vmatpush1.msra.mxu0 0.0
    %324 = vmatprep.subr.mxu0 0.0
    %325 = vmatpush1.msra.mxu0 0.0
    %326 = vmatprep.subr.mxu0 0.0
    %327 = vmatpush1.msra.mxu0 0.0
    %328 = vmatprep.subr.mxu0 0.0
    %329 = vmatpush1.msra.mxu0 0.0
    %330 = vmatprep.subr.mxu0 0.0
    %331 = vmatpush1.msra.mxu0 0.0
    %332 = vmatprep.subr.mxu0 0.0
    %333 = vmatpush1.msra.mxu0 0.0
    %334 = vmatprep.subr.mxu0 0.0
    %335 = vmatpush1.msra.mxu0 0.0
    %336 = vmatprep.subr.mxu0 0.0
    %337 = vmatpush1.msra.mxu0 0.0
    %338 = vmatprep.subr.mxu0 0.0
    %339 = vmatpush1.msra.mxu0 0.0
    %340 = vmatprep.subr.mxu0 0.0
    %341 = vmatpush1.msra.mxu0 0.0
    %342 = vmatprep.subr.mxu0 0.0
    %343 = vmatpush1.msra.mxu0 0.0
    %344 = vmatprep.subr.mxu0 0.0
    %345 = vmatpush1.msra.mxu0 0.0
    %346 = vmatprep.subr.mxu0 0.0
    %347 = vmatpush1.msra.mxu0 0.0
    %348 = vmatprep.subr.mxu0 0.0
    %349 = vmatpush1.msra.mxu0 0.0
    %350 = vmatprep.subr.mxu0 0.0
    %351 = vmatpush1.msra.mxu0 0.0
    %352 = vmatprep.subr.mxu0 0.0
    %353 = vmatpush1.msra.mxu0 0.0
    %354 = vmatprep.subr.mxu0 0.0
    %355 = vmatpush1.msra.mxu0 0.0
    %356 = vmatprep.subr.mxu0 0.0
    %357 = vmatpush1.msra.mxu0 0.0
    %358 = vmatprep.subr.mxu0 0.0
    %359 = vmatpush1.msra.mxu0 0.0
    %360 = vmatprep.subr.mxu0 0.0
    %361 = vmatpush1.msra.mxu0 0.0
    %362 = vmatprep.mubr.f32.mxu0 0.0
    %v363 = vand.u32 %v39, 4294901760
    %v364 = vsub.f32 %v39, %v363
    %v365 = vand.u32 %v364, 4294901760
    %366 = vmatmul.mubr.f32.gmra.mrb[0].mxu0 %v365
    %v367 = vpop.f32.mrb[0].mxu0
    %v368 = vadd.f32 %v287, %v367
    %v369 = vpop.f32.mrb[0].mxu0
    %370 = vmatprep.mubr.f32.mxu0 0.0
    %v371 = vand.u32 %v42, 4294901760
    %v372 = vsub.f32 %v42, %v371
    %v373 = vand.u32 %v372, 4294901760
    %374 = vmatmul.mubr.f32.gmra.mrb[0].mxu0 %v373
    %v375 = vpop.f32.mrb[0].mxu0
    %v376 = vadd.f32 %v294, %v375
    %v377 = vpop.f32.mrb[0].mxu0
    %378 = vdwg.mxu0
    %379 = vmatprep.subr.mxu0 0.0
    %v380 = vand.u32 %v46, 4294901760
    %v381 = vsub.f32 %v46, %v380
    %v382 = vand.u32 %v381, 4294901760
    %383 = vmatpush1.msra.mxu0 %v382
    %384 = vmatprep.subr.mxu0 0.0
    %385 = vmatpush1.msra.mxu0 0.0
    %386 = vmatprep.subr.mxu0 0.0
    %387 = vmatpush1.msra.mxu0 0.0
    %388 = vmatprep.subr.mxu0 0.0
    %389 = vmatpush1.msra.mxu0 0.0
    %390 = vmatprep.subr.mxu0 0.0
    %391 = vmatpush1.msra.mxu0 0.0
    %392 = vmatprep.subr.mxu0 0.0
    %393 = vmatpush1.msra.mxu0 0.0
    %394 = vmatprep.subr.mxu0 0.0
    %395 = vmatpush1.msra.mxu0 0.0
    %396 = vmatprep.subr.mxu0 0.0
    %397 = vmatpush1.msra.mxu0 0.0
    %398 = vmatprep.subr.mxu0 0.0
    %399 = vmatpush1.msra.mxu0 0.0
    %400 = vmatprep.subr.mxu0 0.0
    %401 = vmatpush1.msra.mxu0 0.0
    %402 = vmatprep.subr.mxu0 0.0
    %403 = vmatpush1.msra.mxu0 0.0
    %404 = vmatprep.subr.mxu0 0.0
    %405 = vmatpush1.msra.mxu0 0.0
    %406 = vmatprep.subr.mxu0 0.0
    %407 = vmatpush1.msra.mxu0 0.0
    %408 = vmatprep.subr.mxu0 0.0
    %409 = vmatpush1.msra.mxu0 0.0
    %410 = vmatprep.subr.mxu0 0.0
    %411 = vmatpush1.msra.mxu0 0.0
    %412 = vmatprep.subr.mxu0 0.0
    %413 = vmatpush1.msra.mxu0 0.0
    %414 = vmatprep.subr.mxu0 0.0
    %415 = vmatpush1.msra.mxu0 0.0
    %416 = vmatprep.subr.mxu0 0.0
    %417 = vmatpush1.msra.mxu0 0.0
    %418 = vmatprep.subr.mxu0 0.0
    %419 = vmatpush1.msra.mxu0 0.0
    %420 = vmatprep.subr.mxu0 0.0
    %421 = vmatpush1.msra.mxu0 0.0
    %422 = vmatprep.subr.mxu0 0.0
    %423 = vmatpush1.msra.mxu0 0.0
    %424 = vmatprep.subr.mxu0 0.0
    %425 = vmatpush1.msra.mxu0 0.0
    %426 = vmatprep.subr.mxu0 0.0
    %427 = vmatpush1.msra.mxu0 0.0
    %428 = vmatprep.subr.mxu0 0.0
    %429 = vmatpush1.msra.mxu0 0.0
    %430 = vmatprep.subr.mxu0 0.0
    %431 = vmatpush1.msra.mxu0 0.0
    %432 = vmatprep.subr.mxu0 0.0
    %433 = vmatpush1.msra.mxu0 0.0
    %434 = vmatprep.subr.mxu0 0.0
    %435 = vmatpush1.msra.mxu0 0.0
    %436 = vmatprep.subr.mxu0 0.0
    %437 = vmatpush1.msra.mxu0 0.0
    %438 = vmatprep.subr.mxu0 0.0
    %439 = vmatpush1.msra.mxu0 0.0
    %440 = vmatprep.subr.mxu0 0.0
    %441 = vmatpush1.msra.mxu0 0.0
    %442 = vmatprep.subr.mxu0 0.0
    %443 = vmatpush1.msra.mxu0 0.0
    %444 = vmatprep.subr.mxu0 0.0
    %445 = vmatpush1.msra.mxu0 0.0
    %446 = vmatprep.mubr.f32.mxu0 0.0
    %v447 = vand.u32 %v39, 4294901760
    %448 = vmatmul.mubr.f32.gmra.mrb[0].mxu0 %v447
    %v449 = vpop.f32.mrb[0].mxu0
    %v450 = vadd.f32 %v368, %v449
    %v451 = vpop.f32.mrb[0].mxu0
    %452 = vmatprep.mubr.f32.mxu0 0.0
    %v453 = vand.u32 %v42, 4294901760
    %454 = vmatmul.mubr.f32.gmra.mrb[0].mxu0 %v453
    %v455 = vpop.f32.mrb[0].mxu0
    %v456 = vadd.f32 %v376, %v455
    %v457 = vpop.f32.mrb[0].mxu0
    %458 = vdwg.mxu0
    %459 = vmatprep.subr.mxu0 0.0
    %v460 = vand.u32 %v46, 4294901760
    %461 = vmatpush1.msra.mxu0 %v460
    %462 = vmatprep.subr.mxu0 0.0
    %463 = vmatpush1.msra.mxu0 0.0
    %464 = vmatprep.subr.mxu0 0.0
    %465 = vmatpush1.msra.mxu0 0.0
    %466 = vmatprep.subr.mxu0 0.0
    %467 = vmatpush1.msra.mxu0 0.0
    %468 = vmatprep.subr.mxu0 0.0
    %469 = vmatpush1.msra.mxu0 0.0
    %470 = vmatprep.subr.mxu0 0.0
    %471 = vmatpush1.msra.mxu0 0.0
    %472 = vmatprep.subr.mxu0 0.0
    %473 = vmatpush1.msra.mxu0 0.0
    %474 = vmatprep.subr.mxu0 0.0
    %475 = vmatpush1.msra.mxu0 0.0
    %476 = vmatprep.subr.mxu0 0.0
    %477 = vmatpush1.msra.mxu0 0.0
    %478 = vmatprep.subr.mxu0 0.0
    %479 = vmatpush1.msra.mxu0 0.0
    %480 = vmatprep.subr.mxu0 0.0
    %481 = vmatpush1.msra.mxu0 0.0
    %482 = vmatprep.subr.mxu0 0.0
    %483 = vmatpush1.msra.mxu0 0.0
    %484 = vmatprep.subr.mxu0 0.0
    %485 = vmatpush1.msra.mxu0 0.0
    %486 = vmatprep.subr.mxu0 0.0
    %487 = vmatpush1.msra.mxu0 0.0
    %488 = vmatprep.subr.mxu0 0.0
    %489 = vmatpush1.msra.mxu0 0.0
    %490 = vmatprep.subr.mxu0 0.0
    %491 = vmatpush1.msra.mxu0 0.0
    %492 = vmatprep.subr.mxu0 0.0
    %493 = vmatpush1.msra.mxu0 0.0
    %494 = vmatprep.subr.mxu0 0.0
    %495 = vmatpush1.msra.mxu0 0.0
    %496 = vmatprep.subr.mxu0 0.0
    %497 = vmatpush1.msra.mxu0 0.0
    %498 = vmatprep.subr.mxu0 0.0
    %499 = vmatpush1.msra.mxu0 0.0
    %500 = vmatprep.subr.mxu0 0.0
    %501 = vmatpush1.msra.mxu0 0.0
    %502 = vmatprep.subr.mxu0 0.0
    %503 = vmatpush1.msra.mxu0 0.0
    %504 = vmatprep.subr.mxu0 0.0
    %505 = vmatpush1.msra.mxu0 0.0
    %506 = vmatprep.subr.mxu0 0.0
    %507 = vmatpush1.msra.mxu0 0.0
    %508 = vmatprep.subr.mxu0 0.0
    %509 = vmatpush1.msra.mxu0 0.0
    %510 = vmatprep.subr.mxu0 0.0
    %511 = vmatpush1.msra.mxu0 0.0
    %512 = vmatprep.subr.mxu0 0.0
    %513 = vmatpush1.msra.mxu0 0.0
    %514 = vmatprep.subr.mxu0 0.0
    %515 = vmatpush1.msra.mxu0 0.0
    %516 = vmatprep.subr.mxu0 0.0
    %517 = vmatpush1.msra.mxu0 0.0
    %518 = vmatprep.subr.mxu0 0.0
    %519 = vmatpush1.msra.mxu0 0.0
    %520 = vmatprep.subr.mxu0 0.0
    %521 = vmatpush1.msra.mxu0 0.0
    %522 = vmatprep.subr.mxu0 0.0
    %523 = vmatpush1.msra.mxu0 0.0
    %524 = vmatprep.mubr.f32.mxu0 0.0
    %v525 = vand.u32 %v39, 4294901760
    %526 = vmatmul.mubr.f32.gmra.mrb[0].mxu0 %v525
    %v527 = vpop.f32.mrb[0].mxu0
    %v528 = vadd.f32 %v450, %v527
    %v529 = vpop.f32.mrb[0].mxu0
    %530 = vmatprep.mubr.f32.mxu0 0.0
    %v531 = vand.u32 %v42, 4294901760
    %532 = vmatmul.mubr.f32.gmra.mrb[0].mxu0 %v531
    %v533 = vpop.f32.mrb[0].mxu0
    %v534 = vadd.f32 %v456, %v533
    %v535 = vpop.f32.mrb[0].mxu0
    %536 = vdwg.mxu0
    %v537 = vmax.f32 %v528, 0.0
    %v538 = vmax.f32 %v534, 0.0
    %v539 = vld [vmem:[%s3] sm:$0x1]
    %s540 = sld [smem:[#allocation2]]
    %v541 = vstv %s540
    %vm542 = vcmask 130048
    %v544 = vsel %vm542, %v539, 0
    %546 = vmatprep.subr.mxu0 0.0
    %v547 = vand.u32 %v537, 4294901760
    %548 = vmatpush1.msra.mxu0 %v547
    %549 = vmatprep.subr.mxu0 0.0
    %v550 = vand.u32 %v538, 4294901760
    %551 = vmatpush1.msra.mxu0 %v550
    %552 = vmatprep.subr.mxu0 0.0
    %553 = vmatpush1.msra.mxu0 0.0
    %554 = vmatprep.subr.mxu0 0.0
    %555 = vmatpush1.msra.mxu0 0.0
    %556 = vmatprep.subr.mxu0 0.0
    %557 = vmatpush1.msra.mxu0 0.0
    %558 = vmatprep.subr.mxu0 0.0
    %559 = vmatpush1.msra.mxu0 0.0
    %560 = vmatprep.subr.mxu0 0.0
    %561 = vmatpush1.msra.mxu0 0.0
    %562 = vmatprep.subr.mxu0 0.0
    %563 = vmatpush1.msra.mxu0 0.0
    %564 = vmatprep.subr.mxu0 0.0
    %565 = vmatpush1.msra.mxu0 0.0
    %566 = vmatprep.subr.mxu0 0.0
    %567 = vmatpush1.msra.mxu0 0.0
    %568 = vmatprep.subr.mxu0 0.0
    %569 = vmatpush1.msra.mxu0 0.0
    %570 = vmatprep.subr.mxu0 0.0
    %571 = vmatpush1.msra.mxu0 0.0
    %572 = vmatprep.subr.mxu0 0.0
    %573 = vmatpush1.msra.mxu0 0.0
    %574 = vmatprep.subr.mxu0 0.0
    %575 = vmatpush1.msra.mxu0 0.0
    %576 = vmatprep.subr.mxu0 0.0
    %577 = vmatpush1.msra.mxu0 0.0
    %578 = vmatprep.subr.mxu0 0.0
    %579 = vmatpush1.msra.mxu0 0.0
    %580 = vmatprep.subr.mxu0 0.0
    %581 = vmatpush1.msra.mxu0 0.0
    %582 = vmatprep.subr.mxu0 0.0
    %583 = vmatpush1.msra.mxu0 0.0
    %584 = vmatprep.subr.mxu0 0.0
    %585 = vmatpush1.msra.mxu0 0.0
    %586 = vmatprep.subr.mxu0 0.0
    %587 = vmatpush1.msra.mxu0 0.0
    %588 = vmatprep.subr.mxu0 0.0
    %589 = vmatpush1.msra.mxu0 0.0
    %590 = vmatprep.subr.mxu0 0.0
    %591 = vmatpush1.msra.mxu0 0.0
    %592 = vmatprep.subr.mxu0 0.0
    %593 = vmatpush1.msra.mxu0 0.0
    %594 = vmatprep.subr.mxu0 0.0
    %595 = vmatpush1.msra.mxu0 0.0
    %596 = vmatprep.subr.mxu0 0.0
    %597 = vmatpush1.msra.mxu0 0.0
    %598 = vmatprep.subr.mxu0 0.0
    %599 = vmatpush1.msra.mxu0 0.0
    %600 = vmatprep.subr.mxu0 0.0
    %601 = vmatpush1.msra.mxu0 0.0
    %602 = vmatprep.subr.mxu0 0.0
    %603 = vmatpush1.msra.mxu0 0.0
    %604 = vmatprep.subr.mxu0 0.0
    %605 = vmatpush1.msra.mxu0 0.0
    %606 = vmatprep.subr.mxu0 0.0
    %607 = vmatpush1.msra.mxu0 0.0
    %608 = vmatprep.subr.mxu0 0.0
    %609 = vmatpush1.msra.mxu0 0.0
    %610 = vmatprep.subr.mxu0 0.0
    %611 = vmatpush1.msra.mxu0 0.0
    %612 = vmatprep.mubr.f32.mxu0 0.0
    %v613 = vand.u32 %v544, 4294901760
    %v614 = vsub.f32 %v544, %v613
    %v615 = vand.u32 %v614, 4294901760
    %v616 = vsub.f32 %v614, %v615
    %v617 = vand.u32 %v616, 4294901760
    %618 = vmatmul.mubr.f32.gmra.mrb[0].mxu0 %v617
    %v619 = vpop.f32.mrb[0].mxu0
    %v620 = vadd.f32 %v541, %v619
    %v621 = vpop.f32.mrb[0].mxu0
    %622 = vdwg.mxu0
    %623 = vmatprep.subr.mxu0 0.0
    %v624 = vand.u32 %v537, 4294901760
    %v625 = vsub.f32 %v537, %v624
    %v626 = vand.u32 %v625, 4294901760
    %v627 = vsub.f32 %v625, %v626
    %v628 = vand.u32 %v627, 4294901760
    %629 = vmatpush1.msra.mxu0 %v628
    %630 = vmatprep.subr.mxu0 0.0
    %v631 = vand.u32 %v538, 4294901760
    %v632 = vsub.f32 %v538, %v631
    %v633 = vand.u32 %v632, 4294901760
    %v634 = vsub.f32 %v632, %v633
    %v635 = vand.u32 %v634, 4294901760
    %636 = vmatpush1.msra.mxu0 %v635
    %637 = vmatprep.subr.mxu0 0.0
    %638 = vmatpush1.msra.mxu0 0.0
    %639 = vmatprep.subr.mxu0 0.0
    %640 = vmatpush1.msra.mxu0 0.0
    %641 = vmatprep.subr.mxu0 0.0
    %642 = vmatpush1.msra.mxu0 0.0
    %643 = vmatprep.subr.mxu0 0.0
    %644 = vmatpush1.msra.mxu0 0.0
    %645 = vmatprep.subr.mxu0 0.0
    %646 = vmatpush1.msra.mxu0 0.0
    %647 = vmatprep.subr.mxu0 0.0
    %648 = vmatpush1.msra.mxu0 0.0
    %649 = vmatprep.subr.mxu0 0.0
    %650 = vmatpush1.msra.mxu0 0.0
    %651 = vmatprep.subr.mxu0 0.0
    %652 = vmatpush1.msra.mxu0 0.0
    %653 = vmatprep.subr.mxu0 0.0
    %654 = vmatpush1.msra.mxu0 0.0
    %655 = vmatprep.subr.mxu0 0.0
    %656 = vmatpush1.msra.mxu0 0.0
    %657 = vmatprep.subr.mxu0 0.0
    %658 = vmatpush1.msra.mxu0 0.0
    %659 = vmatprep.subr.mxu0 0.0
    %660 = vmatpush1.msra.mxu0 0.0
    %661 = vmatprep.subr.mxu0 0.0
    %662 = vmatpush1.msra.mxu0 0.0
    %663 = vmatprep.subr.mxu0 0.0
    %664 = vmatpush1.msra.mxu0 0.0
    %665 = vmatprep.subr.mxu0 0.0
    %666 = vmatpush1.msra.mxu0 0.0
    %667 = vmatprep.subr.mxu0 0.0
    %668 = vmatpush1.msra.mxu0 0.0
    %669 = vmatprep.subr.mxu0 0.0
    %670 = vmatpush1.msra.mxu0 0.0
    %671 = vmatprep.subr.mxu0 0.0
    %672 = vmatpush1.msra.mxu0 0.0
    %673 = vmatprep.subr.mxu0 0.0
    %674 = vmatpush1.msra.mxu0 0.0
    %675 = vmatprep.subr.mxu0 0.0
    %676 = vmatpush1.msra.mxu0 0.0
    %677 = vmatprep.subr.mxu0 0.0
    %678 = vmatpush1.msra.mxu0 0.0
    %679 = vmatprep.subr.mxu0 0.0
    %680 = vmatpush1.msra.mxu0 0.0
    %681 = vmatprep.subr.mxu0 0.0
    %682 = vmatpush1.msra.mxu0 0.0
    %683 = vmatprep.subr.mxu0 0.0
    %684 = vmatpush1.msra.mxu0 0.0
    %685 = vmatprep.subr.mxu0 0.0
    %686 = vmatpush1.msra.mxu0 0.0
    %687 = vmatprep.subr.mxu0 0.0
    %688 = vmatpush1.msra.mxu0 0.0
    %689 = vmatprep.subr.mxu0 0.0
    %690 = vmatpush1.msra.mxu0 0.0
    %691 = vmatprep.subr.mxu0 0.0
    %692 = vmatpush1.msra.mxu0 0.0
    %693 = vmatprep.subr.mxu0 0.0
    %694 = vmatpush1.msra.mxu0 0.0
    %695 = vmatprep.subr.mxu0 0.0
    %696 = vmatpush1.msra.mxu0 0.0
    %697 = vmatprep.mubr.f32.mxu0 0.0
    %v698 = vand.u32 %v544, 4294901760
    %699 = vmatmul.mubr.f32.gmra.mrb[0].mxu0 %v698
    %v700 = vpop.f32.mrb[0].mxu0
    %v701 = vadd.f32 %v620, %v700
    %v702 = vpop.f32.mrb[0].mxu0
    %703 = vdwg.mxu0
    %704 = vmatprep.subr.mxu0 0.0
    %v705 = vand.u32 %v537, 4294901760
    %v706 = vsub.f32 %v537, %v705
    %707 = vmatpush1.msra.mxu0 %v706
    %708 = vmatprep.subr.mxu0 0.0
    %v709 = vand.u32 %v538, 4294901760
    %v710 = vsub.f32 %v538, %v709
    %711 = vmatpush1.msra.mxu0 %v710
    %712 = vmatprep.subr.mxu0 0.0
    %713 = vmatpush1.msra.mxu0 0.0
    %714 = vmatprep.subr.mxu0 0.0
    %715 = vmatpush1.msra.mxu0 0.0
    %716 = vmatprep.subr.mxu0 0.0
    %717 = vmatpush1.msra.mxu0 0.0
    %718 = vmatprep.subr.mxu0 0.0
    %719 = vmatpush1.msra.mxu0 0.0
    %720 = vmatprep.subr.mxu0 0.0
    %721 = vmatpush1.msra.mxu0 0.0
    %722 = vmatprep.subr.mxu0 0.0
    %723 = vmatpush1.msra.mxu0 0.0
    %724 = vmatprep.subr.mxu0 0.0
    %725 = vmatpush1.msra.mxu0 0.0
    %726 = vmatprep.subr.mxu0 0.0
    %727 = vmatpush1.msra.mxu0 0.0
    %728 = vmatprep.subr.mxu0 0.0
    %729 = vmatpush1.msra.mxu0 0.0
    %730 = vmatprep.subr.mxu0 0.0
    %731 = vmatpush1.msra.mxu0 0.0
    %732 = vmatprep.subr.mxu0 0.0
    %733 = vmatpush1.msra.mxu0 0.0
    %734 = vmatprep.subr.mxu0 0.0
    %735 = vmatpush1.msra.mxu0 0.0
    %736 = vmatprep.subr.mxu0 0.0
    %737 = vmatpush1.msra.mxu0 0.0
    %738 = vmatprep.subr.mxu0 0.0
    %739 = vmatpush1.msra.mxu0 0.0
    %740 = vmatprep.subr.mxu0 0.0
    %741 = vmatpush1.msra.mxu0 0.0
    %742 = vmatprep.subr.mxu0 0.0
    %743 = vmatpush1.msra.mxu0 0.0
    %744 = vmatprep.subr.mxu0 0.0
    %745 = vmatpush1.msra.mxu0 0.0
    %746 = vmatprep.subr.mxu0 0.0
    %747 = vmatpush1.msra.mxu0 0.0
    %748 = vmatprep.subr.mxu0 0.0
    %749 = vmatpush1.msra.mxu0 0.0
    %750 = vmatprep.subr.mxu0 0.0
    %751 = vmatpush1.msra.mxu0 0.0
    %752 = vmatprep.subr.mxu0 0.0
    %753 = vmatpush1.msra.mxu0 0.0
    %754 = vmatprep.subr.mxu0 0.0
    %755 = vmatpush1.msra.mxu0 0.0
    %756 = vmatprep.subr.mxu0 0.0
    %757 = vmatpush1.msra.mxu0 0.0
    %758 = vmatprep.subr.mxu0 0.0
    %759 = vmatpush1.msra.mxu0 0.0
    %760 = vmatprep.subr.mxu0 0.0
    %761 = vmatpush1.msra.mxu0 0.0
    %762 = vmatprep.subr.mxu0 0.0
    %763 = vmatpush1.msra.mxu0 0.0
    %764 = vmatprep.subr.mxu0 0.0
    %765 = vmatpush1.msra.mxu0 0.0
    %766 = vmatprep.subr.mxu0 0.0
    %767 = vmatpush1.msra.mxu0 0.0
    %768 = vmatprep.subr.mxu0 0.0
    %769 = vmatpush1.msra.mxu0 0.0
    %770 = vmatprep.subr.mxu0 0.0
    %771 = vmatpush1.msra.mxu0 0.0
    %772 = vmatprep.mubr.f32.mxu0 0.0
    %v773 = vand.u32 %v544, 4294901760
    %v774 = vsub.f32 %v544, %v773
    %775 = vmatmul.mubr.f32.gmra.mrb[0].mxu0 %v774
    %v776 = vpop.f32.mrb[0].mxu0
    %v777 = vadd.f32 %v701, %v776
    %v778 = vpop.f32.mrb[0].mxu0
    %779 = vdwg.mxu0
    %780 = vmatprep.subr.mxu0 0.0
    %v781 = vand.u32 %v537, 4294901760
    %782 = vmatpush1.msra.mxu0 %v781
    %783 = vmatprep.subr.mxu0 0.0
    %v784 = vand.u32 %v538, 4294901760
    %785 = vmatpush1.msra.mxu0 %v784
    %786 = vmatprep.subr.mxu0 0.0
    %787 = vmatpush1.msra.mxu0 0.0
    %788 = vmatprep.subr.mxu0 0.0
    %789 = vmatpush1.msra.mxu0 0.0
    %790 = vmatprep.subr.mxu0 0.0
    %791 = vmatpush1.msra.mxu0 0.0
    %792 = vmatprep.subr.mxu0 0.0
    %793 = vmatpush1.msra.mxu0 0.0
    %794 = vmatprep.subr.mxu0 0.0
    %795 = vmatpush1.msra.mxu0 0.0
    %796 = vmatprep.subr.mxu0 0.0
    %797 = vmatpush1.msra.mxu0 0.0
    %798 = vmatprep.subr.mxu0 0.0
    %799 = vmatpush1.msra.mxu0 0.0
    %800 = vmatprep.subr.mxu0 0.0
    %801 = vmatpush1.msra.mxu0 0.0
    %802 = vmatprep.subr.mxu0 0.0
    %803 = vmatpush1.msra.mxu0 0.0
    %804 = vmatprep.subr.mxu0 0.0
    %805 = vmatpush1.msra.mxu0 0.0
    %806 = vmatprep.subr.mxu0 0.0
    %807 = vmatpush1.msra.mxu0 0.0
    %808 = vmatprep.subr.mxu0 0.0
    %809 = vmatpush1.msra.mxu0 0.0
    %810 = vmatprep.subr.mxu0 0.0
    %811 = vmatpush1.msra.mxu0 0.0
    %812 = vmatprep.subr.mxu0 0.0
    %813 = vmatpush1.msra.mxu0 0.0
    %814 = vmatprep.subr.mxu0 0.0
    %815 = vmatpush1.msra.mxu0 0.0
    %816 = vmatprep.subr.mxu0 0.0
    %817 = vmatpush1.msra.mxu0 0.0
    %818 = vmatprep.subr.mxu0 0.0
    %819 = vmatpush1.msra.mxu0 0.0
    %820 = vmatprep.subr.mxu0 0.0
    %821 = vmatpush1.msra.mxu0 0.0
    %822 = vmatprep.subr.mxu0 0.0
    %823 = vmatpush1.msra.mxu0 0.0
    %824 = vmatprep.subr.mxu0 0.0
    %825 = vmatpush1.msra.mxu0 0.0
    %826 = vmatprep.subr.mxu0 0.0
    %827 = vmatpush1.msra.mxu0 0.0
    %828 = vmatprep.subr.mxu0 0.0
    %829 = vmatpush1.msra.mxu0 0.0
    %830 = vmatprep.subr.mxu0 0.0
    %831 = vmatpush1.msra.mxu0 0.0
    %832 = vmatprep.subr.mxu0 0.0
    %833 = vmatpush1.msra.mxu0 0.0
    %834 = vmatprep.subr.mxu0 0.0
    %835 = vmatpush1.msra.mxu0 0.0
    %836 = vmatprep.subr.mxu0 0.0
    %837 = vmatpush1.msra.mxu0 0.0
    %838 = vmatprep.subr.mxu0 0.0
    %839 = vmatpush1.msra.mxu0 0.0
    %840 = vmatprep.subr.mxu0 0.0
    %841 = vmatpush1.msra.mxu0 0.0
    %842 = vmatprep.subr.mxu0 0.0
    %843 = vmatpush1.msra.mxu0 0.0
    %844 = vmatprep.subr.mxu0 0.0
    %845 = vmatpush1.msra.mxu0 0.0
    %846 = vmatprep.mubr.f32.mxu0 0.0
    %v847 = vand.u32 %v544, 4294901760
    %v848 = vsub.f32 %v544, %v847
    %v849 = vand.u32 %v848, 4294901760
    %850 = vmatmul.mubr.f32.gmra.mrb[0].mxu0 %v849
    %v851 = vpop.f32.mrb[0].mxu0
    %v852 = vadd.f32 %v777, %v851
    %v853 = vpop.f32.mrb[0].mxu0
    %854 = vdwg.mxu0
    %855 = vmatprep.subr.mxu0 0.0
    %v856 = vand.u32 %v537, 4294901760
    %v857 = vsub.f32 %v537, %v856
    %v858 = vand.u32 %v857, 4294901760
    %859 = vmatpush1.msra.mxu0 %v858
    %860 = vmatprep.subr.mxu0 0.0
    %v861 = vand.u32 %v538, 4294901760
    %v862 = vsub.f32 %v538, %v861
    %v863 = vand.u32 %v862, 4294901760
    %864 = vmatpush1.msra.mxu0 %v863
    %865 = vmatprep.subr.mxu0 0.0
    %866 = vmatpush1.msra.mxu0 0.0
    %867 = vmatprep.subr.mxu0 0.0
    %868 = vmatpush1.msra.mxu0 0.0
    %869 = vmatprep.subr.mxu0 0.0
    %870 = vmatpush1.msra.mxu0 0.0
    %871 = vmatprep.subr.mxu0 0.0
    %872 = vmatpush1.msra.mxu0 0.0
    %873 = vmatprep.subr.mxu0 0.0
    %874 = vmatpush1.msra.mxu0 0.0
    %875 = vmatprep.subr.mxu0 0.0
    %876 = vmatpush1.msra.mxu0 0.0
    %877 = vmatprep.subr.mxu0 0.0
    %878 = vmatpush1.msra.mxu0 0.0
    %879 = vmatprep.subr.mxu0 0.0
    %880 = vmatpush1.msra.mxu0 0.0
    %881 = vmatprep.subr.mxu0 0.0
    %882 = vmatpush1.msra.mxu0 0.0
    %883 = vmatprep.subr.mxu0 0.0
    %884 = vmatpush1.msra.mxu0 0.0
    %885 = vmatprep.subr.mxu0 0.0
    %886 = vmatpush1.msra.mxu0 0.0
    %887 = vmatprep.subr.mxu0 0.0
    %888 = vmatpush1.msra.mxu0 0.0
    %889 = vmatprep.subr.mxu0 0.0
    %890 = vmatpush1.msra.mxu0 0.0
    %891 = vmatprep.subr.mxu0 0.0
    %892 = vmatpush1.msra.mxu0 0.0
    %893 = vmatprep.subr.mxu0 0.0
    %894 = vmatpush1.msra.mxu0 0.0
    %895 = vmatprep.subr.mxu0 0.0
    %896 = vmatpush1.msra.mxu0 0.0
    %897 = vmatprep.subr.mxu0 0.0
    %898 = vmatpush1.msra.mxu0 0.0
    %899 = vmatprep.subr.mxu0 0.0
    %900 = vmatpush1.msra.mxu0 0.0
    %901 = vmatprep.subr.mxu0 0.0
    %902 = vmatpush1.msra.mxu0 0.0
    %903 = vmatprep.subr.mxu0 0.0
    %904 = vmatpush1.msra.mxu0 0.0
    %905 = vmatprep.subr.mxu0 0.0
    %906 = vmatpush1.msra.mxu0 0.0
    %907 = vmatprep.subr.mxu0 0.0
    %908 = vmatpush1.msra.mxu0 0.0
    %909 = vmatprep.subr.mxu0 0.0
    %910 = vmatpush1.msra.mxu0 0.0
    %911 = vmatprep.subr.mxu0 0.0
    %912 = vmatpush1.msra.mxu0 0.0
    %913 = vmatprep.subr.mxu0 0.0
    %914 = vmatpush1.msra.mxu0 0.0
    %915 = vmatprep.subr.mxu0 0.0
    %916 = vmatpush1.msra.mxu0 0.0
    %917 = vmatprep.subr.mxu0 0.0
    %918 = vmatpush1.msra.mxu0 0.0
    %919 = vmatprep.subr.mxu0 0.0
    %920 = vmatpush1.msra.mxu0 0.0
    %921 = vmatprep.subr.mxu0 0.0
    %922 = vmatpush1.msra.mxu0 0.0
    %923 = vmatprep.subr.mxu0 0.0
    %924 = vmatpush1.msra.mxu0 0.0
    %925 = vmatprep.mubr.f32.mxu0 0.0
    %v926 = vand.u32 %v544, 4294901760
    %927 = vmatmul.mubr.f32.gmra.mrb[0].mxu0 %v926
    %v928 = vpop.f32.mrb[0].mxu0
    %v929 = vadd.f32 %v852, %v928
    %v930 = vpop.f32.mrb[0].mxu0
    %931 = vdwg.mxu0
    %932 = vmatprep.subr.mxu0 0.0
    %v933 = vand.u32 %v537, 4294901760
    %934 = vmatpush1.msra.mxu0 %v933
    %935 = vmatprep.subr.mxu0 0.0
    %v936 = vand.u32 %v538, 4294901760
    %937 = vmatpush1.msra.mxu0 %v936
    %938 = vmatprep.subr.mxu0 0.0
    %939 = vmatpush1.msra.mxu0 0.0
    %940 = vmatprep.subr.mxu0 0.0
    %941 = vmatpush1.msra.mxu0 0.0
    %942 = vmatprep.subr.mxu0 0.0
    %943 = vmatpush1.msra.mxu0 0.0
    %944 = vmatprep.subr.mxu0 0.0
    %945 = vmatpush1.msra.mxu0 0.0
    %946 = vmatprep.subr.mxu0 0.0
    %947 = vmatpush1.msra.mxu0 0.0
    %948 = vmatprep.subr.mxu0 0.0
    %949 = vmatpush1.msra.mxu0 0.0
    %950 = vmatprep.subr.mxu0 0.0
    %951 = vmatpush1.msra.mxu0 0.0
    %952 = vmatprep.subr.mxu0 0.0
    %953 = vmatpush1.msra.mxu0 0.0
    %954 = vmatprep.subr.mxu0 0.0
    %955 = vmatpush1.msra.mxu0 0.0
    %956 = vmatprep.subr.mxu0 0.0
    %957 = vmatpush1.msra.mxu0 0.0
    %958 = vmatprep.subr.mxu0 0.0
    %959 = vmatpush1.msra.mxu0 0.0
    %960 = vmatprep.subr.mxu0 0.0
    %961 = vmatpush1.msra.mxu0 0.0
    %962 = vmatprep.subr.mxu0 0.0
    %963 = vmatpush1.msra.mxu0 0.0
    %964 = vmatprep.subr.mxu0 0.0
    %965 = vmatpush1.msra.mxu0 0.0
    %966 = vmatprep.subr.mxu0 0.0
    %967 = vmatpush1.msra.mxu0 0.0
    %968 = vmatprep.subr.mxu0 0.0
    %969 = vmatpush1.msra.mxu0 0.0
    %970 = vmatprep.subr.mxu0 0.0
    %971 = vmatpush1.msra.mxu0 0.0
    %972 = vmatprep.subr.mxu0 0.0
    %973 = vmatpush1.msra.mxu0 0.0
    %974 = vmatprep.subr.mxu0 0.0
    %975 = vmatpush1.msra.mxu0 0.0
    %976 = vmatprep.subr.mxu0 0.0
    %977 = vmatpush1.msra.mxu0 0.0
    %978 = vmatprep.subr.mxu0 0.0
    %979 = vmatpush1.msra.mxu0 0.0
    %980 = vmatprep.subr.mxu0 0.0
    %981 = vmatpush1.msra.mxu0 0.0
    %982 = vmatprep.subr.mxu0 0.0
    %983 = vmatpush1.msra.mxu0 0.0
    %984 = vmatprep.subr.mxu0 0.0
    %985 = vmatpush1.msra.mxu0 0.0
    %986 = vmatprep.subr.mxu0 0.0
    %987 = vmatpush1.msra.mxu0 0.0
    %988 = vmatprep.subr.mxu0 0.0
    %989 = vmatpush1.msra.mxu0 0.0
    %990 = vmatprep.subr.mxu0 0.0
    %991 = vmatpush1.msra.mxu0 0.0
    %992 = vmatprep.subr.mxu0 0.0
    %993 = vmatpush1.msra.mxu0 0.0
    %994 = vmatprep.subr.mxu0 0.0
    %995 = vmatpush1.msra.mxu0 0.0
    %996 = vmatprep.subr.mxu0 0.0
    %997 = vmatpush1.msra.mxu0 0.0
    %998 = vmatprep.mubr.f32.mxu0 0.0
    %v999 = vand.u32 %v544, 4294901760
    %1000 = vmatmul.mubr.f32.gmra.mrb[0].mxu0 %v999
    %v1001 = vpop.f32.mrb[0].mxu0
    %v1002 = vadd.f32 %v929, %v1001
    %v1003 = vpop.f32.mrb[0].mxu0
    %1004 = vdwg.mxu0
    %v1005 = vxor.u32 %v1002, 2147483648
    %v1006 = vmul.f32 %v1005, 1.442695
    %v1007 = vpow.pop %v1006
    %v1008 = vadd.f32 %v1007, 1.0
    %v1009 = vrcp.pop %v1008
    %v1010 = vmul.f32 1.0, %v1009
    %1011 = vst [vmem:[#allocation3] sm:$0x1] %v1010
    // Predicated region
    $region22: #{tpu_custom_call.1} parent=1 // pred_check
      _
    $region23: #{tpu_custom_call.1} parent=1 // pred_check_branch
      %1013 = sbr.rel (0) target = $region25
    $region24: #{tpu_custom_call.1} parent=1 // pred_region
      %s1015 = ssub.s32 16, 16
      %1016 = vsyncadd [#allocation4], %s1015
      %s1018 = sshll.u32 [#allocation3], 4
      %s1019 = int_to_ptr.vmem [resolvable:$true] %s1018
      %1021 = dma.vmem_to_hbm [thread:$0]  %s1019, 16, %s5, [#allocation4]
    $region25: #{tpu_custom_call.1} parent=1 // pred_fallthru
      _
    // Predicated region
    $region26: #{tpu_custom_call.1} parent=1 // pred_check
      _
    $region27: #{tpu_custom_call.1} parent=1 // pred_check_branch
      %1023 = sbr.rel (0) target = $region29
    $region28: #{tpu_custom_call.1} parent=1 // pred_region
      %1024 = dma.done [#allocation4], 16
    $region29: #{tpu_custom_call.1} parent=1 // pred_fallthru
      _
    %1025 = vsyncpa [#allocation4], 1

</llo_original>
